<compile_context>
chip_gen: v6e
topology: v6e:2x2x1
jax: 0.10.0
libtpu: 0.0.40
codegen_flags: <defaults>
</compile_context>

<pallas_src>
import functools

import jax
import jax.numpy as jnp
from jax import lax
from jax.experimental import pallas as pl
from jax.experimental.pallas import tpu as pltpu


def _round_up(x, m):
    return ((x + m - 1) // m) * m


def _affine_kernel(x_ref, w_ref, b_ref, o_ref, acc_ref):
    k = pl.program_id(2)

    @pl.when(k == 0)
    def _init():
        acc_ref[...] = jnp.zeros_like(acc_ref)

    # x tile: (tm, tk); w tile: (tn, tk) in native nn.Linear (out, in) layout.
    # Contract the last axis of both -> (tm, tn). MXU handles the transposed
    # RHS contraction natively, so no weight transpose is ever materialized.
    acc_ref[...] += lax.dot_general(
        x_ref[...],
        w_ref[...],
        dimension_numbers=(((1,), (1,)), ((), ())),
        preferred_element_type=jnp.float32,
    )

    @pl.when(k == pl.num_programs(2) - 1)
    def _finalize():
        o_ref[...] = (acc_ref[...] + b_ref[...].astype(jnp.float32)).astype(o_ref.dtype)


@functools.partial(jax.jit, static_argnames=("tm", "tn", "tk"))
def affine_mapper_forward(x, weight, bias, *, tm=256, tn=512, tk=512):
    """y = x @ weight.T + bias, matching torch.nn.Linear semantics.

    x:      (..., input_dim)
    weight: (output_dim, input_dim)   -- native PyTorch layout (not transposed)
    bias:   (output_dim,)
    """
    out_dim, in_dim = weight.shape
    orig_shape = x.shape
    x2d = x.reshape(-1, in_dim)
    M = x2d.shape[0]

    # Clamp tiles to the (aligned) problem size; keep (8, 128) TPU alignment.
    tm = min(tm, _round_up(M, 8))
    tn = min(tn, _round_up(out_dim, 128))   # lane-dense output (>=128)
    tk = min(tk, _round_up(in_dim, 128))

    Mp = _round_up(M, tm)
    Np = _round_up(out_dim, tn)
    Kp = _round_up(in_dim, tk)

    # Zero-pad only when necessary (no-op for already-aligned shapes).
    if (Mp, Kp) != (M, in_dim):
        x2d = jnp.pad(x2d, ((0, Mp - M), (0, Kp - in_dim)))
    w_p = weight
    if (Np, Kp) != (out_dim, in_dim):
        w_p = jnp.pad(weight, ((0, Np - out_dim), (0, Kp - in_dim)))
    b2d = bias.reshape(1, out_dim)
    if Np != out_dim:
        b2d = jnp.pad(b2d, ((0, 0), (0, Np - out_dim)))

    grid = (Mp // tm, Np // tn, Kp // tk)

    flops = 2 * M * out_dim * in_dim
    bytes_accessed = (
        x2d.size * x2d.dtype.itemsize
        + w_p.size * w_p.dtype.itemsize
        + b2d.size * b2d.dtype.itemsize
        + Mp * Np * x2d.dtype.itemsize
    )

    out = pl.pallas_call(
        _affine_kernel,
        out_shape=jax.ShapeDtypeStruct((Mp, Np), x.dtype),
        grid_spec=pltpu.PrefetchScalarGridSpec(
            num_scalar_prefetch=0,
            grid=grid,
            in_specs=[
                pl.BlockSpec((tm, tk), lambda i, j, k: (i, k)),   # x tile
                pl.BlockSpec((tn, tk), lambda i, j, k: (j, k)),   # weight tile (N,K)
                pl.BlockSpec((1, tn), lambda i, j, k: (0, j)),    # bias tile
            ],
            out_specs=pl.BlockSpec((tm, tn), lambda i, j, k: (i, j)),
            scratch_shapes=[pltpu.VMEM((tm, tn), jnp.float32)],
        ),
        compiler_params=pltpu.CompilerParams(
            dimension_semantics=("parallel", "parallel", "arbitrary"),
        ),
        cost_estimate=pl.CostEstimate(
            flops=flops, transcendentals=0, bytes_accessed=bytes_accessed
        ),
    )(x2d, w_p, b2d)

    out = out[:M, :out_dim]
    return out.reshape(orig_shape[:-1] + (out_dim,))


if __name__ == "__main__":
    # Small deterministic setup consistent with AffineMapper(input_dim, output_dim).
    input_dim, output_dim = 32, 32
    leading = (2, 8)  # arbitrary leading dims, like nn.Linear supports

    key = jax.random.PRNGKey(0)
    kx, kw, kb = jax.random.split(key, 3)

    x = jax.random.normal(kx, leading + (input_dim,), dtype=jnp.float32)
    # Deterministic "kaiming-uniform-ish" init; exact distribution irrelevant here.
    bound = 1.0 / (input_dim ** 0.5)
    weight = jax.random.uniform(
        kw, (output_dim, input_dim), dtype=jnp.float32, minval=-bound, maxval=bound
    )
    bias = jax.random.uniform(
        kb, (output_dim,), dtype=jnp.float32, minval=-bound, maxval=bound
    )

    y = affine_mapper_forward(x, weight, bias)
    y = jax.block_until_ready(y)

    # Reference check against plain JAX (same math as torch.nn.Linear).
    y_ref = x @ weight.T + bias
    assert y.shape == leading + (output_dim,)
    assert jnp.allclose(y, y_ref, atol=1e-4, rtol=1e-4)

    print("KERNEL_OK")
</pallas_src>

<mosaic_0001>
module attributes {stable_mosaic.version = 11 : i64} {
  func.func @_affine_kernel(%arg0: i32, %arg1: i32, %arg2: i32, %arg3: memref<16x128xf32, #tpu.memory_space<vmem>>, %arg4: memref<128x128xf32, #tpu.memory_space<vmem>>, %arg5: memref<1x128xf32, #tpu.memory_space<vmem>>, %arg6: memref<16x128xf32, #tpu.memory_space<vmem>>, %arg7: memref<16x128xf32, #tpu.memory_space<vmem>>) attributes {dimension_semantics = [#tpu.dimension_semantics<parallel>, #tpu.dimension_semantics<parallel>, #tpu.dimension_semantics<arbitrary>], iteration_bounds = array<i64: 1, 1, 1>, scalar_prefetch = 0 : i64, scratch_operands = 1 : i64, tpu.core_type = #tpu.core_type<tc>, window_params = [{transform_indices = @transform_0, window_bounds = array<i64: 16, 128>}, {transform_indices = @transform_1, window_bounds = array<i64: 128, 128>}, {transform_indices = @transform_2, window_bounds = array<i64: 1, 128>}, {transform_indices = @transform_3, window_bounds = array<i64: 16, 128>}]} {
    %c0_i32 = arith.constant 0 : i32
    %0 = arith.cmpi eq, %arg2, %c0_i32 : i32
    %1 = arith.extui %0 : i1 to i32
    %c0_i32_0 = arith.constant 0 : i32
    %2 = arith.cmpi ne, %1, %c0_i32_0 : i32
    scf.if %2 {
      %cst_10 = arith.constant 0.000000e+00 : f32
      %12 = vector.broadcast %cst_10 : f32 to vector<16x128xf32>
      %c0_11 = arith.constant 0 : index
      %c0_12 = arith.constant 0 : index
      %13 = vector.load %arg7[%c0_11, %c0_12] : memref<16x128xf32, #tpu.memory_space<vmem>>, vector<16x128xf32>
      tpu.vector_store %arg7[%c0_11, %c0_12], %12 {strides = array<i32>} : memref<16x128xf32, #tpu.memory_space<vmem>>, vector<16x128xf32>,
    } else {
    }
    %c0 = arith.constant 0 : index
    %c0_1 = arith.constant 0 : index
    %3 = vector.load %arg7[%c0, %c0_1] : memref<16x128xf32, #tpu.memory_space<vmem>>, vector<16x128xf32>
    %c0_2 = arith.constant 0 : index
    %c0_3 = arith.constant 0 : index
    %4 = vector.load %arg3[%c0_2, %c0_3] : memref<16x128xf32, #tpu.memory_space<vmem>>, vector<16x128xf32>
    %c0_4 = arith.constant 0 : index
    %c0_5 = arith.constant 0 : index
    %5 = vector.load %arg4[%c0_4, %c0_5] : memref<128x128xf32, #tpu.memory_space<vmem>>, vector<128x128xf32>
    %cst = arith.constant dense<0.000000e+00> : vector<16x128xf32>
    %6 = tpu.matmul %4, %5, %cst {dimension_numbers = #tpu.dot_dimension_numbers<[1], [1], [0], [0], [0, 0, 1, 0], [], []>} : vector<16x128xf32>, vector<128x128xf32>, vector<16x128xf32> -> vector<16x128xf32>
    %7 = arith.addf %3, %6 : vector<16x128xf32>
    %c0_6 = arith.constant 0 : index
    %c0_7 = arith.constant 0 : index
    %8 = vector.load %arg7[%c0_6, %c0_7] : memref<16x128xf32, #tpu.memory_space<vmem>>, vector<16x128xf32>
    tpu.vector_store %arg7[%c0_6, %c0_7], %7 {strides = array<i32>} : memref<16x128xf32, #tpu.memory_space<vmem>>, vector<16x128xf32>,
    %c0_i32_8 = arith.constant 0 : i32
    %9 = arith.cmpi eq, %arg2, %c0_i32_8 : i32
    %10 = arith.extui %9 : i1 to i32
    %c0_i32_9 = arith.constant 0 : i32
    %11 = arith.cmpi ne, %10, %c0_i32_9 : i32
    scf.if %11 {
      %c0_10 = arith.constant 0 : index
      %c0_11 = arith.constant 0 : index
      %12 = vector.load %arg7[%c0_10, %c0_11] : memref<16x128xf32, #tpu.memory_space<vmem>>, vector<16x128xf32>
      %c0_12 = arith.constant 0 : index
      %c0_13 = arith.constant 0 : index
      %13 = vector.load %arg5[%c0_12, %c0_13] : memref<1x128xf32, #tpu.memory_space<vmem>>, vector<1x128xf32>
      %14 = vector.broadcast %13 : vector<1x128xf32> to vector<16x128xf32>
      %15 = arith.addf %12, %14 : vector<16x128xf32>
      %c0_14 = arith.constant 0 : index
      %c0_15 = arith.constant 0 : index
      %16 = vector.load %arg6[%c0_14, %c0_15] : memref<16x128xf32, #tpu.memory_space<vmem>>, vector<16x128xf32>
      tpu.vector_store %arg6[%c0_14, %c0_15], %15 {strides = array<i32>} : memref<16x128xf32, #tpu.memory_space<vmem>>, vector<16x128xf32>,
    } else {
    }
    return
  }
  func.func @transform_0(%arg0: i32, %arg1: i32, %arg2: i32) -> (i32, i32) {
    %c0_i32 = arith.constant 0 : i32
    return %arg0, %arg2 : i32, i32
  }
  func.func @transform_1(%arg0: i32, %arg1: i32, %arg2: i32) -> (i32, i32) {
    %c0_i32 = arith.constant 0 : i32
    return %arg1, %arg2 : i32, i32
  }
  func.func @transform_2(%arg0: i32, %arg1: i32, %arg2: i32) -> (i32, i32) {
    %c0_i32 = arith.constant 0 : i32
    %c0_i32_0 = arith.constant 0 : i32
    return %c0_i32, %arg1 : i32, i32
  }
  func.func @transform_3(%arg0: i32, %arg1: i32, %arg2: i32) -> (i32, i32) {
    %c0_i32 = arith.constant 0 : i32
    return %arg0, %arg1 : i32, i32
  }
}

</mosaic_0001>

<llo_original>
// kernel: affine_mapper_forward.1
$region0: #{affine_mapper_forward.1}
  #allocation0 [shape = 'u32[]', space=smem, size = 0x4, offset = 0x4, fixed_abs, tag = 'smem constant byte address 0x4 - core index']
  #allocation1 [shape = 'u32[144,128]{1,0:T(1,128)}', space=vmem, size = 0x12000, scoped, tag = 'internal scratch']
  #allocation2 [shape = 'f32[16,128]{1,0:T(8,128)}', space=vmem, size = 0x2000, scoped, tag = 'scratch operand']
  %s0 = inlined_call_operand.vmem [shape: f32[16,128], index: 0, kind: input, shape index: {}]
  %s1 = inlined_call_operand.vmem [shape: f32[128,128], index: 1, kind: input, shape index: {}]
  %s2 = inlined_call_operand.vmem [shape: f32[1,128], index: 2, kind: input, shape index: {}]
  %s3 = inlined_call_operand.vmem [shape: f32[16,128], index: 3, kind: output, shape index: {}]
  %s4 = sld [smem:[#allocation0]]
  $region30: #{affine_mapper_forward.1} parent=0
    _
  %s6 = ssub.s32 1, %s4
  %s7 = scalar_select 0, %s6, %s4
  // Predicated region
  $region2: #{affine_mapper_forward.1} parent=0 // pred_check
    _
  $region3: #{affine_mapper_forward.1} parent=0 // pred_check_branch
    %9 = sbr.rel (0) target = $region5
  $region4: #{affine_mapper_forward.1} parent=0 // pred_region
    _
  $region5: #{affine_mapper_forward.1} parent=0 // pred_fallthru
    _
  // Predicated region
  $region6: #{affine_mapper_forward.1} parent=0 // pred_check
    _
  $region7: #{affine_mapper_forward.1} parent=0 // pred_check_branch
    %11 = sbr.rel (0) target = $region9
  $region8: #{affine_mapper_forward.1} parent=0 // pred_region
    _
  $region9: #{affine_mapper_forward.1} parent=0 // pred_fallthru
    _
  // Predicated region
  $region10: #{affine_mapper_forward.1} parent=0 // pred_check
    _
  $region11: #{affine_mapper_forward.1} parent=0 // pred_check_branch
    %13 = sbr.rel (0) target = $region13
  $region12: #{affine_mapper_forward.1} parent=0 // pred_region
    _
  $region13: #{affine_mapper_forward.1} parent=0 // pred_fallthru
    _
  %p14 = scmp.eq.s32.totalorder 0, 0
  // Predicated region
  $region14: #{affine_mapper_forward.1} parent=0 // pred_check
    %p15 = pneg %p14
  $region15: #{affine_mapper_forward.1} parent=0 // pred_check_branch
    %17 = sbr.rel (%p15) target = $region17
  $region16: #{affine_mapper_forward.1} parent=0 // pred_region
    %18 = vst [vmem:[#allocation2] sm:$0xff] 0.0
    %19 = vst [vmem:[#allocation2 + $0x8] sm:$0xff] 0.0
  $region17: #{affine_mapper_forward.1} parent=0 // pred_fallthru
    _
  %v20 = vld [vmem:[#allocation2] sm:$0xff]
  %v21 = vld [vmem:[#allocation2 + $0x8] sm:$0xff]
  %v22 = vld [vmem:[%s0] sm:$0xff]
  %v23 = vld [vmem:[%s0 + $0x8] sm:$0xff]
  %v24 = vld [vmem:[%s1] sm:$0xff]
  %v25 = vld [vmem:[%s1 + $0x8] sm:$0xff]
  %v26 = vld [vmem:[%s1 + $0x10] sm:$0xff]
  %v27 = vld [vmem:[%s1 + $0x18] sm:$0xff]
  %v28 = vld [vmem:[%s1 + $0x20] sm:$0xff]
  %v29 = vld [vmem:[%s1 + $0x28] sm:$0xff]
  %v30 = vld [vmem:[%s1 + $0x30] sm:$0xff]
  %v31 = vld [vmem:[%s1 + $0x38] sm:$0xff]
  %v32 = vld [vmem:[%s1 + $0x40] sm:$0xff]
  %v33 = vld [vmem:[%s1 + $0x48] sm:$0xff]
  %v34 = vld [vmem:[%s1 + $0x50] sm:$0xff]
  %v35 = vld [vmem:[%s1 + $0x58] sm:$0xff]
  %v36 = vld [vmem:[%s1 + $0x60] sm:$0xff]
  %v37 = vld [vmem:[%s1 + $0x68] sm:$0xff]
  %v38 = vld [vmem:[%s1 + $0x70] sm:$0xff]
  %v39 = vld [vmem:[%s1 + $0x78] sm:$0xff]
  %40 = vmatprep.subr.mxu0 0.0
  %41 = vmatpush1.xpose.msra.mxu0 %v39
  %42 = vmatprep.subr.mxu0 0.0
  %43 = vmatpush1.xpose.msra.mxu0 %v38
  %44 = vmatprep.subr.mxu0 0.0
  %45 = vmatpush1.xpose.msra.mxu0 %v37
  %46 = vmatprep.subr.mxu0 0.0
  %47 = vmatpush1.xpose.msra.mxu0 %v36
  %48 = vmatprep.subr.mxu0 0.0
  %49 = vmatpush1.xpose.msra.mxu0 %v35
  %50 = vmatprep.subr.mxu0 0.0
  %51 = vmatpush1.xpose.msra.mxu0 %v34
  %52 = vmatprep.subr.mxu0 0.0
  %53 = vmatpush1.xpose.msra.mxu0 %v33
  %54 = vmatprep.subr.mxu0 0.0
  %55 = vmatpush1.xpose.msra.mxu0 %v32
  %56 = vmatprep.subr.mxu0 0.0
  %57 = vmatpush1.xpose.msra.mxu0 %v31
  %58 = vmatprep.subr.mxu0 0.0
  %59 = vmatpush1.xpose.msra.mxu0 %v30
  %60 = vmatprep.subr.mxu0 0.0
  %61 = vmatpush1.xpose.msra.mxu0 %v29
  %62 = vmatprep.subr.mxu0 0.0
  %63 = vmatpush1.xpose.msra.mxu0 %v28
  %64 = vmatprep.subr.mxu0 0.0
  %65 = vmatpush1.xpose.msra.mxu0 %v27
  %66 = vmatprep.subr.mxu0 0.0
  %67 = vmatpush1.xpose.msra.mxu0 %v26
  %68 = vmatprep.subr.mxu0 0.0
  %69 = vmatpush1.xpose.msra.mxu0 %v25
  %70 = vmatprep.subr.mxu0 0.0
  %71 = vmatpush1.xpose.msra.mxu0 %v24
  %72 = vmatprep.subr.mxu0 0.0
  %73 = vmatpush2.xpose.msra.mxu0 0.0
  %74 = vmatprep.subr.mxu0 0.0
  %75 = vmatpush2.xpose.msra.mxu0 0.0
  %76 = vmatprep.subr.mxu0 0.0
  %77 = vmatpush2.xpose.msra.mxu0 0.0
  %78 = vmatprep.subr.mxu0 0.0
  %79 = vmatpush2.xpose.msra.mxu0 0.0
  %80 = vmatprep.subr.mxu0 0.0
  %81 = vmatpush2.xpose.msra.mxu0 0.0
  %82 = vmatprep.subr.mxu0 0.0
  %83 = vmatpush2.xpose.msra.mxu0 0.0
  %84 = vmatprep.subr.mxu0 0.0
  %85 = vmatpush2.xpose.msra.mxu0 0.0
  %86 = vmatprep.subr.mxu0 0.0
  %87 = vmatpush2.xpose.msra.mxu0 0.0
  %88 = vmatprep.subr.mxu0 0.0
  %89 = vmatpush2.xpose.msra.mxu0 0.0
  %90 = vmatprep.subr.mxu0 0.0
  %91 = vmatpush2.xpose.msra.mxu0 0.0
  %92 = vmatprep.subr.mxu0 0.0
  %93 = vmatpush2.xpose.msra.mxu0 0.0
  %94 = vmatprep.subr.mxu0 0.0
  %95 = vmatpush2.xpose.msra.mxu0 0.0
  %96 = vmatprep.subr.mxu0 0.0
  %97 = vmatpush2.xpose.msra.mxu0 0.0
  %98 = vmatprep.subr.mxu0 0.0
  %99 = vmatpush2.xpose.msra.mxu0 0.0
  %100 = vmatprep.subr.mxu0 0.0
  %101 = vmatpush2.xpose.msra.mxu0 0.0
  %102 = vmatprep.subr.mxu0 0.0
  %103 = vmatpush2.xpose.msra.mxu0 0.0
  %104 = vmatprep.mubr.f32.mxu0 0.0
  %105 = vmatmul.mubr.f32.gmra.mxu0 %v22
  %v106 = vpop.f32.mrf.mxu0
  %v107 = vadd.f32 0.0, %v106
  %v108 = vpop.f32.mrf.mxu0
  %109 = vmatprep.mubr.f32.mxu0 0.0
  %110 = vmatmul.mubr.f32.gmra.mxu0 %v23
  %v111 = vpop.f32.mrf.mxu0
  %v112 = vadd.f32 0.0, %v111
  %v113 = vpop.f32.mrf.mxu0
  %114 = vdwg.mxu0
  %v115 = vadd.f32 %v20, %v107
  %v116 = vadd.f32 %v21, %v112
  %117 = vst [vmem:[#allocation2] sm:$0xff] %v115
  %118 = vst [vmem:[#allocation2 + $0x8] sm:$0xff] %v116
  // Predicated region
  $region18: #{affine_mapper_forward.1} parent=0 // pred_check
    %p119 = pneg %p14
  $region19: #{affine_mapper_forward.1} parent=0 // pred_check_branch
    %121 = sbr.rel (%p119) target = $region21
  $region20: #{affine_mapper_forward.1} parent=0 // pred_region
    %v122 = vld [vmem:[#allocation2] sm:$0xff]
    %v123 = vld [vmem:[#allocation2 + $0x8] sm:$0xff]
    %v124 = vld [vmem:[%s2] sm:$0x1]
    %v126 = vlaneseq
    %v127 = vshrl.u32 %v126, 7
    %v128 = vsub.s32 0, %v127
    %v129 = vrot.slane %v124, %v128
    %v131 = vadd.f32 %v122, %v129
    %v132 = vadd.f32 %v123, %v129
    %133 = vst [vmem:[%s3] sm:$0xff] %v131
    %134 = vst [vmem:[%s3 + $0x8] sm:$0xff] %v132
  $region21: #{affine_mapper_forward.1} parent=0 // pred_fallthru
    _
  // Predicated region
  $region22: #{affine_mapper_forward.1} parent=0 // pred_check
    _
  $region23: #{affine_mapper_forward.1} parent=0 // pred_check_branch
    %136 = sbr.rel (0) target = $region25
  $region24: #{affine_mapper_forward.1} parent=0 // pred_region
    _
  $region25: #{affine_mapper_forward.1} parent=0 // pred_fallthru
    _
  // Predicated region
  $region26: #{affine_mapper_forward.1} parent=0 // pred_check
    _
  $region27: #{affine_mapper_forward.1} parent=0 // pred_check_branch
    %138 = sbr.rel (0) target = $region29
  $region28: #{affine_mapper_forward.1} parent=0 // pred_region
    _
  $region29: #{affine_mapper_forward.1} parent=0 // pred_fallthru
    _

</llo_original>
